<compile_context>
chip_gen: v7x
topology: tpu7x:2x2x1
jax: 0.10.0
libtpu: 0.0.40
codegen_flags: <defaults>
</compile_context>

<pallas_src>
import functools

import jax
import jax.numpy as jnp
from jax import lax
from jax.experimental import pallas as pl
from jax.experimental.pallas import tpu as pltpu


def _window_sum(x, axis, k, s, out_len):
    """Sum of k tap-shifted slices along `axis`, with the stride folded in."""
    acc = lax.slice_in_dim(x, 0, (out_len - 1) * s + 1, stride=s, axis=axis)
    for t in range(1, k):
        acc = acc + lax.slice_in_dim(
            x, t, (out_len - 1) * s + t + 1, stride=s, axis=axis
        )
    return acc


def _avgpool_conv_kernel(scale_ref, x_ref, o_ref, *, kh, kw, sh, sw, ho, wo,
                         ph, pw, h_axis, w_axis, h_first):
    # scale_ref: (1,) f32 in SMEM (the single shared conv weight)
    # x_ref:     unpadded input block in VMEM
    # o_ref:     output block in VMEM
    x = x_ref[...].astype(jnp.float32)

    # Fused zero padding: pure VMEM work, no extra HBM pass (static branches).
    if ph:
        zs = list(x.shape)
        zs[h_axis] = ph
        z = jnp.zeros(zs, jnp.float32)
        x = jnp.concatenate([z, x, z], axis=h_axis)
    if pw:
        zs = list(x.shape)
        zs[w_axis] = pw
        z = jnp.zeros(zs, jnp.float32)
        x = jnp.concatenate([z, x, z], axis=w_axis)

    # Separable window sum (valid because all taps share one weight); run the
    # pass with the smaller intermediate first.
    if h_first:
        tmp = _window_sum(x, h_axis, kh, sh, ho)
        acc = _window_sum(tmp, w_axis, kw, sw, wo)
    else:
        tmp = _window_sum(x, w_axis, kw, sw, wo)
        acc = _window_sum(tmp, h_axis, kh, sh, ho)

    # Single hoisted scale multiply.
    o_ref[...] = (acc * scale_ref[0]).astype(o_ref.dtype)


def _pair(v):
    return (v, v) if isinstance(v, int) else tuple(v)


def _round_up(v, m):
    return (v + m - 1) // m * m


def avgpool_conv(x, weight, *, stride=(1, 1), padding=(0, 0)):
    """x: (N, 1, H, W); weight: (1, 1, kh, kw) with all-equal entries.

    Returns (N, 1, Ho, Wo), matching nn.Conv2d(1, 1, k, stride, padding, bias=False).
    """
    n, c, h, w = x.shape
    assert c == 1, "AvgPoolConv has in_channels=1"
    kh, kw = int(weight.shape[-2]), int(weight.shape[-1])
    sh, sw = _pair(stride)
    ph, pw = _pair(padding)
    hp, wp = h + 2 * ph, w + 2 * pw
    ho = (hp - kh) // sh + 1
    wo = (wp - kw) // sw + 1

    # AvgPoolConv contract: every tap equals 1/(kh*kw); the separable sum +
    # single scale is only valid under that contract, so we read one element.
    scale = weight.reshape(-1)[:1].astype(jnp.float32)          # (1,)

    itemsize = x.dtype.itemsize
    sub = 8 * max(1, 4 // itemsize)          # dtype-aware sublane multiple

    # Per-generation VMEM budget (v5e/v6e: 128 MiB, v7x: 64 MiB per TC).
    try:
        vmem_cap = int(pltpu.get_tpu_info().vmem_capacity_bytes)
    except Exception:
        vmem_cap = 64 * 1024 * 1024
    budget = int(vmem_cap * 0.45)

    def block_bytes(tn, lanes):
        """Double-buffered in/out blocks + in-kernel f32 temporaries."""
        if lanes:                             # blocks are (H, W, TN) / (Ho, Wo, TN)
            tl = _round_up(tn, 128)
            in_blk = h * _round_up(w, sub) * tl * itemsize
            out_blk = ho * _round_up(wo, sub) * tl * itemsize
            tmp = (hp * _round_up(wp, 8) + ho * _round_up(wp, 8)
                   + ho * _round_up(wo, 8)) * tl * 4
        else:                                 # blocks are (TN, H, W) / (TN, Ho, Wo)
            in_blk = tn * _round_up(h, sub) * _round_up(w, 128) * itemsize
            out_blk = tn * _round_up(ho, sub) * _round_up(wo, 128) * itemsize
            tmp = tn * (_round_up(hp, 8) * _round_up(wp, 128)
                        + _round_up(ho, 8) * _round_up(wp, 128)
                        + _round_up(ho, 8) * _round_up(wo, 128)) * 4
        return 2 * (in_blk + out_blk) + tmp

    # Narrow images -> batch on lanes (lane-dense stores / writeback).
    batch_on_lanes = wp < 128
    if batch_on_lanes and block_bytes(min(n, 128), True) > budget:
        batch_on_lanes = False                # image too large for a 128-lane block

    if batch_on_lanes:
        tn = min(n, 128)
        while tn < n and block_bytes(min(n, tn + 128), True) <= budget:
            tn = min(n, tn + 128)             # stays a multiple of 128 (or == n)
    else:
        tn = 1
        while tn < n and block_bytes(min(n, tn * 2), False) <= budget:
            tn = min(n, tn * 2)
    # TODO(synk): for very large images, tile H with a (kh-1)-row halo as a
    # second grid axis instead of loading the full (H, W) plane per step.

    usage = block_bytes(tn, batch_on_lanes)
    vmem_limit = int(min(0.9 * vmem_cap, max(2 * usage, 32 * 1024 * 1024)))

    h_first = ho * wp <= hp * wo              # smaller intermediate first

    kernel = functools.partial(
        _avgpool_conv_kernel,
        kh=kh, kw=kw, sh=sh, sw=sw, ho=ho, wo=wo, ph=ph, pw=pw,
        h_axis=(0 if batch_on_lanes else 1),
        w_axis=(1 if batch_on_lanes else 2),
        h_first=h_first,
    )

    cost = pl.CostEstimate(
        flops=n * ho * wo * (kh + kw - 1),
        transcendentals=0,
        bytes_accessed=n * h * w * itemsize + n * ho * wo * itemsize,
    )

    if batch_on_lanes:
        # Lane-dense layout: (H, W, N) so batch sits on lanes.  The wrapper
        # transpose is layout plumbing that buys unmasked stores and dense DMA.
        x_in = jnp.transpose(x[:, 0], (1, 2, 0))                 # (H, W, N)
        in_spec = pl.BlockSpec((h, w, tn), lambda i: (0, 0, i))
        out_spec = pl.BlockSpec((ho, wo, tn), lambda i: (0, 0, i))
        out_shape = jax.ShapeDtypeStruct((ho, wo, n), x.dtype)
    else:
        x_in = x[:, 0]                                           # (N, H, W)
        in_spec = pl.BlockSpec((tn, h, w), lambda i: (i, 0, 0))
        out_spec = pl.BlockSpec((tn, ho, wo), lambda i: (i, 0, 0))
        out_shape = jax.ShapeDtypeStruct((n, ho, wo), x.dtype)

    # TODO(synk): sweep pipeline_mode=pl.Buffered(3) on the input spec if a
    # trace ever shows exposed per-step DMA issue latency.
    out = pl.pallas_call(
        kernel,
        out_shape=out_shape,
        grid_spec=pltpu.PrefetchScalarGridSpec(
            num_scalar_prefetch=0,
            grid=(pl.cdiv(n, tn),),
            in_specs=[
                pl.BlockSpec(memory_space=pltpu.MemorySpace.SMEM),
                in_spec,
            ],
            out_specs=out_spec,
        ),
        compiler_params=pltpu.CompilerParams(
            dimension_semantics=("parallel",),
            vmem_limit_bytes=vmem_limit,
        ),
        cost_estimate=cost,
    )(scale, x_in)

    if batch_on_lanes:
        out = jnp.transpose(out, (2, 0, 1))                      # (N, Ho, Wo)
    return out[:, None, :, :]                                    # back to NCHW


if __name__ == "__main__":
    # Module config: kernel_size=(3,3), stride=1, padding=0
    kernel_size = (3, 3)
    stride = (1, 1)
    padding = (0, 0)

    # Deterministic parameter init per __init__: fill(1.0) then /= kh*kw
    weight = jnp.full(
        (1, 1, kernel_size[0], kernel_size[1]),
        1.0 / (kernel_size[0] * kernel_size[1]),
        dtype=jnp.float32,
    )

    key = jax.random.PRNGKey(0)
    x = jax.random.normal(key, (2, 1, 16, 16), dtype=jnp.float32)

    out = avgpool_conv(x, weight, stride=stride, padding=padding)
    out = jax.block_until_ready(out)

    # Reference check against XLA conv (same semantics as nn.Conv2d, bias=False)
    ref = jax.lax.conv_general_dilated(
        x, weight, window_strides=stride,
        padding=[(padding[0], padding[0]), (padding[1], padding[1])],
        dimension_numbers=("NCHW", "OIHW", "NCHW"),
    )
    assert out.shape == (2, 1, 14, 14), out.shape
    assert jnp.allclose(out, ref, atol=1e-5), "mismatch vs reference conv"

    print("KERNEL_OK")
</pallas_src>

<mosaic_0001>
module attributes {stable_mosaic.version = 11 : i64} {
  func.func @_avgpool_conv_kernel(%arg0: i32, %arg1: memref<1xf32, #tpu.memory_space<smem>>, %arg2: memref<16x16x2xf32, #tpu.memory_space<vmem>>, %arg3: memref<14x14x2xf32, #tpu.memory_space<vmem>>) attributes {dimension_semantics = [#tpu.dimension_semantics<parallel>], iteration_bounds = array<i64: 1>, scalar_prefetch = 0 : i64, scratch_operands = 0 : i64, tpu.core_type = #tpu.core_type<tc>, window_params = [{transform_indices = @transform_0, window_bounds = array<i64: 1>}, {transform_indices = @transform_1, window_bounds = array<i64: 16, 16, 2>}, {transform_indices = @transform_2, window_bounds = array<i64: 14, 14, 2>}]} {
    %c0 = arith.constant 0 : index
    %c0_0 = arith.constant 0 : index
    %c0_1 = arith.constant 0 : index
    %0 = vector.load %arg2[%c0, %c0_0, %c0_1] : memref<16x16x2xf32, #tpu.memory_space<vmem>>, vector<16x16x2xf32>
    %1 = vector.extract_strided_slice %0 {offsets = [0, 0, 0], sizes = [14, 16, 2], strides = [1, 1, 1]} : vector<16x16x2xf32> to vector<14x16x2xf32>
    %2 = vector.extract_strided_slice %0 {offsets = [1, 0, 0], sizes = [14, 16, 2], strides = [1, 1, 1]} : vector<16x16x2xf32> to vector<14x16x2xf32>
    %3 = arith.addf %1, %2 : vector<14x16x2xf32>
    %4 = vector.extract_strided_slice %0 {offsets = [2, 0, 0], sizes = [14, 16, 2], strides = [1, 1, 1]} : vector<16x16x2xf32> to vector<14x16x2xf32>
    %5 = arith.addf %3, %4 : vector<14x16x2xf32>
    %6 = vector.extract_strided_slice %5 {offsets = [0, 0, 0], sizes = [14, 14, 2], strides = [1, 1, 1]} : vector<14x16x2xf32> to vector<14x14x2xf32>
    %7 = vector.extract_strided_slice %5 {offsets = [0, 1, 0], sizes = [14, 14, 2], strides = [1, 1, 1]} : vector<14x16x2xf32> to vector<14x14x2xf32>
    %8 = arith.addf %6, %7 : vector<14x14x2xf32>
    %9 = vector.extract_strided_slice %5 {offsets = [0, 2, 0], sizes = [14, 14, 2], strides = [1, 1, 1]} : vector<14x16x2xf32> to vector<14x14x2xf32>
    %10 = arith.addf %8, %9 : vector<14x14x2xf32>
    %c0_2 = arith.constant 0 : index
    %11 = memref.load %arg1[%c0_2] : memref<1xf32, #tpu.memory_space<smem>>
    %12 = vector.broadcast %11 : f32 to vector<14x14x2xf32>
    %13 = arith.mulf %10, %12 : vector<14x14x2xf32>
    %c0_3 = arith.constant 0 : index
    %c0_4 = arith.constant 0 : index
    %c0_5 = arith.constant 0 : index
    %14 = vector.load %arg3[%c0_3, %c0_4, %c0_5] : memref<14x14x2xf32, #tpu.memory_space<vmem>>, vector<14x14x2xf32>
    tpu.vector_store %arg3[%c0_3, %c0_4, %c0_5], %13 {strides = array<i32>} : memref<14x14x2xf32, #tpu.memory_space<vmem>>, vector<14x14x2xf32>,
    return
  }
  func.func @transform_0(%arg0: i32) -> i32 {
    %c0_i32 = arith.constant 0 : i32
    %c0_i32_0 = arith.constant 0 : i32
    return %c0_i32 : i32
  }
  func.func @transform_1(%arg0: i32) -> (i32, i32, i32) {
    %c0_i32 = arith.constant 0 : i32
    %c0_i32_0 = arith.constant 0 : i32
    %c0_i32_1 = arith.constant 0 : i32
    return %c0_i32, %c0_i32_0, %arg0 : i32, i32, i32
  }
  func.func @transform_2(%arg0: i32) -> (i32, i32, i32) {
    %c0_i32 = arith.constant 0 : i32
    %c0_i32_0 = arith.constant 0 : i32
    %c0_i32_1 = arith.constant 0 : i32
    return %c0_i32, %c0_i32_0, %arg0 : i32, i32, i32
  }
}

</mosaic_0001>

<llo_original>
// kernel: tpu_custom_call.1
$region0: #{tpu_custom_call.1}
  #allocation0 [shape = 'u32[]', space=smem, size = 0x4, offset = 0x4, fixed_abs, tag = 'smem constant byte address 0x4 - core index']
  #allocation1 [shape = 'u32[144,128]{1,0:T(1,128)}', space=vmem, size = 0x12000, scoped, tag = 'internal scratch']
  #allocation2 [shape = 'f32[1]{0:T(128)S(6)}', space=smem, size = 0x200, scoped, tag = 'scoped memory for tpu_custom_call.1']
  %s0 = inlined_call_operand.<no memory space> [shape: f32[1], index: 0, kind: input, shape index: {}]
  %s1 = inlined_call_operand.vmem [shape: f32[16,16,2], index: 1, kind: input, shape index: {}]
  %s2 = inlined_call_operand.vmem [shape: f32[14,14,2], index: 2, kind: output, shape index: {}]
  %s3 = sld [smem:[#allocation0]]
  $region18: #{tpu_custom_call.1} parent=0
    _
  %s5 = ssub.s32 1, %s3
  %s6 = scalar_select 0, %s5, %s3
  %7 = sst [smem:[#allocation2]] %s0
  // Predicated region
  $region2: #{tpu_custom_call.1} parent=0 // pred_check
    _
  $region3: #{tpu_custom_call.1} parent=0 // pred_check_branch
    %9 = sbr.rel (0) target = $region5
  $region4: #{tpu_custom_call.1} parent=0 // pred_region
    _
  $region5: #{tpu_custom_call.1} parent=0 // pred_fallthru
    _
  // Predicated region
  $region6: #{tpu_custom_call.1} parent=0 // pred_check
    _
  $region7: #{tpu_custom_call.1} parent=0 // pred_check_branch
    %11 = sbr.rel (0) target = $region9
  $region8: #{tpu_custom_call.1} parent=0 // pred_region
    _
  $region9: #{tpu_custom_call.1} parent=0 // pred_fallthru
    _
  %v12 = vld [vmem:[%s1] sm:$0xff]
  %v13 = vld [vmem:[%s1 + $0x8] sm:$0xff]
  %v14 = vld [vmem:[%s1 + $0x10] sm:$0xff]
  %v15 = vld [vmem:[%s1 + $0x18] sm:$0xff]
  %v16 = vld [vmem:[%s1 + $0x20] sm:$0xff]
  %v17 = vld [vmem:[%s1 + $0x28] sm:$0xff]
  %v18 = vld [vmem:[%s1 + $0x30] sm:$0xff]
  %v19 = vld [vmem:[%s1 + $0x38] sm:$0xff]
  %v20 = vld [vmem:[%s1 + $0x40] sm:$0xff]
  %v21 = vld [vmem:[%s1 + $0x48] sm:$0xff]
  %v22 = vld [vmem:[%s1 + $0x50] sm:$0xff]
  %v23 = vld [vmem:[%s1 + $0x58] sm:$0xff]
  %v24 = vld [vmem:[%s1 + $0x60] sm:$0xff]
  %v25 = vld [vmem:[%s1 + $0x68] sm:$0xff]
  %v26 = vld [vmem:[%s1 + $0x70] sm:$0xff]
  %v27 = vld [vmem:[%s1 + $0x78] sm:$0xff]
  %v28 = vld [vmem:[%s1 + $0x80] sm:$0xff]
  %v29 = vld [vmem:[%s1 + $0x88] sm:$0xff]
  %v30 = vld [vmem:[%s1 + $0x90] sm:$0xff]
  %v31 = vld [vmem:[%s1 + $0x98] sm:$0xff]
  %v32 = vld [vmem:[%s1 + $0xa0] sm:$0xff]
  %v33 = vld [vmem:[%s1 + $0xa8] sm:$0xff]
  %v34 = vld [vmem:[%s1 + $0xb0] sm:$0xff]
  %v35 = vld [vmem:[%s1 + $0xb8] sm:$0xff]
  %v36 = vld [vmem:[%s1 + $0xc0] sm:$0xff]
  %v37 = vld [vmem:[%s1 + $0xc8] sm:$0xff]
  %v38 = vld [vmem:[%s1 + $0xd0] sm:$0xff]
  %v39 = vld [vmem:[%s1 + $0xd8] sm:$0xff]
  %v40 = vld [vmem:[%s1 + $0xe0] sm:$0xff]
  %v41 = vld [vmem:[%s1 + $0xe8] sm:$0xff]
  %v42 = vld [vmem:[%s1 + $0xf0] sm:$0xff]
  %v43 = vld [vmem:[%s1 + $0xf8] sm:$0xff]
  %v44 = vadd.f32 %v12, %v14
  %v45 = vadd.f32 %v13, %v15
  %v46 = vadd.f32 %v14, %v16
  %v47 = vadd.f32 %v15, %v17
  %v48 = vadd.f32 %v16, %v18
  %v49 = vadd.f32 %v17, %v19
  %v50 = vadd.f32 %v18, %v20
  %v51 = vadd.f32 %v19, %v21
  %v52 = vadd.f32 %v20, %v22
  %v53 = vadd.f32 %v21, %v23
  %v54 = vadd.f32 %v22, %v24
  %v55 = vadd.f32 %v23, %v25
  %v56 = vadd.f32 %v24, %v26
  %v57 = vadd.f32 %v25, %v27
  %v58 = vadd.f32 %v26, %v28
  %v59 = vadd.f32 %v27, %v29
  %v60 = vadd.f32 %v28, %v30
  %v61 = vadd.f32 %v29, %v31
  %v62 = vadd.f32 %v30, %v32
  %v63 = vadd.f32 %v31, %v33
  %v64 = vadd.f32 %v32, %v34
  %v65 = vadd.f32 %v33, %v35
  %v66 = vadd.f32 %v34, %v36
  %v67 = vadd.f32 %v35, %v37
  %v68 = vadd.f32 %v36, %v38
  %v69 = vadd.f32 %v37, %v39
  %v70 = vadd.f32 %v38, %v40
  %v71 = vadd.f32 %v39, %v41
  %v72 = vadd.f32 %v44, %v16
  %v73 = vadd.f32 %v45, %v17
  %v74 = vadd.f32 %v46, %v18
  %v75 = vadd.f32 %v47, %v19
  %v76 = vadd.f32 %v48, %v20
  %v77 = vadd.f32 %v49, %v21
  %v78 = vadd.f32 %v50, %v22
  %v79 = vadd.f32 %v51, %v23
  %v80 = vadd.f32 %v52, %v24
  %v81 = vadd.f32 %v53, %v25
  %v82 = vadd.f32 %v54, %v26
  %v83 = vadd.f32 %v55, %v27
  %v84 = vadd.f32 %v56, %v28
  %v85 = vadd.f32 %v57, %v29
  %v86 = vadd.f32 %v58, %v30
  %v87 = vadd.f32 %v59, %v31
  %v88 = vadd.f32 %v60, %v32
  %v89 = vadd.f32 %v61, %v33
  %v90 = vadd.f32 %v62, %v34
  %v91 = vadd.f32 %v63, %v35
  %v92 = vadd.f32 %v64, %v36
  %v93 = vadd.f32 %v65, %v37
  %v94 = vadd.f32 %v66, %v38
  %v95 = vadd.f32 %v67, %v39
  %v96 = vadd.f32 %v68, %v40
  %v97 = vadd.f32 %v69, %v41
  %v98 = vadd.f32 %v70, %v42
  %v99 = vadd.f32 %v71, %v43
  %vm128 = vcmask 1046528
  %v129 = vrot.slane %v72, 1
  %v130 = vrot.slane %v73, 1
  %v131 = vsel %vm128, %v129, %v130
  %v132 = vrot.slane %v74, 1
  %v133 = vrot.slane %v75, 1
  %v134 = vsel %vm128, %v132, %v133
  %v135 = vrot.slane %v76, 1
  %v136 = vrot.slane %v77, 1
  %v137 = vsel %vm128, %v135, %v136
  %v138 = vrot.slane %v78, 1
  %v139 = vrot.slane %v79, 1
  %v140 = vsel %vm128, %v138, %v139
  %v141 = vrot.slane %v80, 1
  %v142 = vrot.slane %v81, 1
  %v143 = vsel %vm128, %v141, %v142
  %v144 = vrot.slane %v82, 1
  %v145 = vrot.slane %v83, 1
  %v146 = vsel %vm128, %v144, %v145
  %v147 = vrot.slane %v84, 1
  %v148 = vrot.slane %v85, 1
  %v149 = vsel %vm128, %v147, %v148
  %v150 = vrot.slane %v86, 1
  %v151 = vrot.slane %v87, 1
  %v152 = vsel %vm128, %v150, %v151
  %v153 = vrot.slane %v88, 1
  %v154 = vrot.slane %v89, 1
  %v155 = vsel %vm128, %v153, %v154
  %v156 = vrot.slane %v90, 1
  %v157 = vrot.slane %v91, 1
  %v158 = vsel %vm128, %v156, %v157
  %v159 = vrot.slane %v92, 1
  %v160 = vrot.slane %v93, 1
  %v161 = vsel %vm128, %v159, %v160
  %v162 = vrot.slane %v94, 1
  %v163 = vrot.slane %v95, 1
  %v164 = vsel %vm128, %v162, %v163
  %v165 = vrot.slane %v96, 1
  %v166 = vrot.slane %v97, 1
  %v167 = vsel %vm128, %v165, %v166
  %v168 = vrot.slane %v98, 1
  %v169 = vrot.slane %v99, 1
  %v170 = vsel %vm128, %v168, %v169
  %v199 = vadd.f32 %v72, %v131
  %v200 = vadd.f32 %v73, %v130
  %v201 = vadd.f32 %v74, %v134
  %v202 = vadd.f32 %v75, %v133
  %v203 = vadd.f32 %v76, %v137
  %v204 = vadd.f32 %v77, %v136
  %v205 = vadd.f32 %v78, %v140
  %v206 = vadd.f32 %v79, %v139
  %v207 = vadd.f32 %v80, %v143
  %v208 = vadd.f32 %v81, %v142
  %v209 = vadd.f32 %v82, %v146
  %v210 = vadd.f32 %v83, %v145
  %v211 = vadd.f32 %v84, %v149
  %v212 = vadd.f32 %v85, %v148
  %v213 = vadd.f32 %v86, %v152
  %v214 = vadd.f32 %v87, %v151
  %v215 = vadd.f32 %v88, %v155
  %v216 = vadd.f32 %v89, %v154
  %v217 = vadd.f32 %v90, %v158
  %v218 = vadd.f32 %v91, %v157
  %v219 = vadd.f32 %v92, %v161
  %v220 = vadd.f32 %v93, %v160
  %v221 = vadd.f32 %v94, %v164
  %v222 = vadd.f32 %v95, %v163
  %v223 = vadd.f32 %v96, %v167
  %v224 = vadd.f32 %v97, %v166
  %v225 = vadd.f32 %v98, %v170
  %v226 = vadd.f32 %v99, %v169
  %vm227 = vcmask 1045504
  %v228 = vrot.slane %v72, 2
  %v229 = vrot.slane %v73, 2
  %v230 = vsel %vm227, %v228, %v229
  %v231 = vrot.slane %v74, 2
  %v232 = vrot.slane %v75, 2
  %v233 = vsel %vm227, %v231, %v232
  %v234 = vrot.slane %v76, 2
  %v235 = vrot.slane %v77, 2
  %v236 = vsel %vm227, %v234, %v235
  %v237 = vrot.slane %v78, 2
  %v238 = vrot.slane %v79, 2
  %v239 = vsel %vm227, %v237, %v238
  %v240 = vrot.slane %v80, 2
  %v241 = vrot.slane %v81, 2
  %v242 = vsel %vm227, %v240, %v241
  %v243 = vrot.slane %v82, 2
  %v244 = vrot.slane %v83, 2
  %v245 = vsel %vm227, %v243, %v244
  %v246 = vrot.slane %v84, 2
  %v247 = vrot.slane %v85, 2
  %v248 = vsel %vm227, %v246, %v247
  %v249 = vrot.slane %v86, 2
  %v250 = vrot.slane %v87, 2
  %v251 = vsel %vm227, %v249, %v250
  %v252 = vrot.slane %v88, 2
  %v253 = vrot.slane %v89, 2
  %v254 = vsel %vm227, %v252, %v253
  %v255 = vrot.slane %v90, 2
  %v256 = vrot.slane %v91, 2
  %v257 = vsel %vm227, %v255, %v256
  %v258 = vrot.slane %v92, 2
  %v259 = vrot.slane %v93, 2
  %v260 = vsel %vm227, %v258, %v259
  %v261 = vrot.slane %v94, 2
  %v262 = vrot.slane %v95, 2
  %v263 = vsel %vm227, %v261, %v262
  %v264 = vrot.slane %v96, 2
  %v265 = vrot.slane %v97, 2
  %v266 = vsel %vm227, %v264, %v265
  %v267 = vrot.slane %v98, 2
  %v268 = vrot.slane %v99, 2
  %v269 = vsel %vm227, %v267, %v268
  %v298 = vadd.f32 %v199, %v230
  %v299 = vadd.f32 %v200, %v229
  %v300 = vadd.f32 %v201, %v233
  %v301 = vadd.f32 %v202, %v232
  %v302 = vadd.f32 %v203, %v236
  %v303 = vadd.f32 %v204, %v235
  %v304 = vadd.f32 %v205, %v239
  %v305 = vadd.f32 %v206, %v238
  %v306 = vadd.f32 %v207, %v242
  %v307 = vadd.f32 %v208, %v241
  %v308 = vadd.f32 %v209, %v245
  %v309 = vadd.f32 %v210, %v244
  %v310 = vadd.f32 %v211, %v248
  %v311 = vadd.f32 %v212, %v247
  %v312 = vadd.f32 %v213, %v251
  %v313 = vadd.f32 %v214, %v250
  %v314 = vadd.f32 %v215, %v254
  %v315 = vadd.f32 %v216, %v253
  %v316 = vadd.f32 %v217, %v257
  %v317 = vadd.f32 %v218, %v256
  %v318 = vadd.f32 %v219, %v260
  %v319 = vadd.f32 %v220, %v259
  %v320 = vadd.f32 %v221, %v263
  %v321 = vadd.f32 %v222, %v262
  %v322 = vadd.f32 %v223, %v266
  %v323 = vadd.f32 %v224, %v265
  %v324 = vadd.f32 %v225, %v269
  %v325 = vadd.f32 %v226, %v268
  %s326 = sld [smem:[#allocation2]]
  %v327 = vstv %s326
  %v328 = vmul.f32 %v298, %v327
  %v329 = vmul.f32 %v299, %v327
  %v330 = vmul.f32 %v300, %v327
  %v331 = vmul.f32 %v301, %v327
  %v332 = vmul.f32 %v302, %v327
  %v333 = vmul.f32 %v303, %v327
  %v334 = vmul.f32 %v304, %v327
  %v335 = vmul.f32 %v305, %v327
  %v336 = vmul.f32 %v306, %v327
  %v337 = vmul.f32 %v307, %v327
  %v338 = vmul.f32 %v308, %v327
  %v339 = vmul.f32 %v309, %v327
  %v340 = vmul.f32 %v310, %v327
  %v341 = vmul.f32 %v311, %v327
  %v342 = vmul.f32 %v312, %v327
  %v343 = vmul.f32 %v313, %v327
  %v344 = vmul.f32 %v314, %v327
  %v345 = vmul.f32 %v315, %v327
  %v346 = vmul.f32 %v316, %v327
  %v347 = vmul.f32 %v317, %v327
  %v348 = vmul.f32 %v318, %v327
  %v349 = vmul.f32 %v319, %v327
  %v350 = vmul.f32 %v320, %v327
  %v351 = vmul.f32 %v321, %v327
  %v352 = vmul.f32 %v322, %v327
  %v353 = vmul.f32 %v323, %v327
  %v354 = vmul.f32 %v324, %v327
  %v355 = vmul.f32 %v325, %v327
  %vm356 = vcmask 15360
  %357 = vst.msk [vmem:[%s2] sm:$0xff] %vm356, %v328
  %vm358 = vcmask 13312
  %359 = vst.msk [vmem:[%s2 + $0x8] sm:$0x3f] %vm358, %v329
  %360 = vst.msk [vmem:[%s2 + $0x10] sm:$0xff] %vm356, %v330
  %361 = vst.msk [vmem:[%s2 + $0x18] sm:$0x3f] %vm358, %v331
  %362 = vst.msk [vmem:[%s2 + $0x20] sm:$0xff] %vm356, %v332
  %363 = vst.msk [vmem:[%s2 + $0x28] sm:$0x3f] %vm358, %v333
  %364 = vst.msk [vmem:[%s2 + $0x30] sm:$0xff] %vm356, %v334
  %365 = vst.msk [vmem:[%s2 + $0x38] sm:$0x3f] %vm358, %v335
  %366 = vst.msk [vmem:[%s2 + $0x40] sm:$0xff] %vm356, %v336
  %367 = vst.msk [vmem:[%s2 + $0x48] sm:$0x3f] %vm358, %v337
  %368 = vst.msk [vmem:[%s2 + $0x50] sm:$0xff] %vm356, %v338
  %369 = vst.msk [vmem:[%s2 + $0x58] sm:$0x3f] %vm358, %v339
  %370 = vst.msk [vmem:[%s2 + $0x60] sm:$0xff] %vm356, %v340
  %371 = vst.msk [vmem:[%s2 + $0x68] sm:$0x3f] %vm358, %v341
  %372 = vst.msk [vmem:[%s2 + $0x70] sm:$0xff] %vm356, %v342
  %373 = vst.msk [vmem:[%s2 + $0x78] sm:$0x3f] %vm358, %v343
  %374 = vst.msk [vmem:[%s2 + $0x80] sm:$0xff] %vm356, %v344
  %375 = vst.msk [vmem:[%s2 + $0x88] sm:$0x3f] %vm358, %v345
  %376 = vst.msk [vmem:[%s2 + $0x90] sm:$0xff] %vm356, %v346
  %377 = vst.msk [vmem:[%s2 + $0x98] sm:$0x3f] %vm358, %v347
  %378 = vst.msk [vmem:[%s2 + $0xa0] sm:$0xff] %vm356, %v348
  %379 = vst.msk [vmem:[%s2 + $0xa8] sm:$0x3f] %vm358, %v349
  %380 = vst.msk [vmem:[%s2 + $0xb0] sm:$0xff] %vm356, %v350
  %381 = vst.msk [vmem:[%s2 + $0xb8] sm:$0x3f] %vm358, %v351
  %382 = vst.msk [vmem:[%s2 + $0xc0] sm:$0xff] %vm356, %v352
  %383 = vst.msk [vmem:[%s2 + $0xc8] sm:$0x3f] %vm358, %v353
  %384 = vst.msk [vmem:[%s2 + $0xd0] sm:$0xff] %vm356, %v354
  %385 = vst.msk [vmem:[%s2 + $0xd8] sm:$0x3f] %vm358, %v355
  // Predicated region
  $region10: #{tpu_custom_call.1} parent=0 // pred_check
    _
  $region11: #{tpu_custom_call.1} parent=0 // pred_check_branch
    %387 = sbr.rel (0) target = $region13
  $region12: #{tpu_custom_call.1} parent=0 // pred_region
    _
  $region13: #{tpu_custom_call.1} parent=0 // pred_fallthru
    _
  // Predicated region
  $region14: #{tpu_custom_call.1} parent=0 // pred_check
    _
  $region15: #{tpu_custom_call.1} parent=0 // pred_check_branch
    %389 = sbr.rel (0) target = $region17
  $region16: #{tpu_custom_call.1} parent=0 // pred_region
    _
  $region17: #{tpu_custom_call.1} parent=0 // pred_fallthru
    _

</llo_original>
